<compile_context>
chip_gen: v7x
topology: tpu7x:2x2x1
jax: 0.10.0
libtpu: 0.0.40
codegen_flags: <defaults>
</compile_context>

<pallas_src>
import math

import jax
import jax.numpy as jnp
from jax.experimental import pallas as pl
from jax.experimental.pallas import tpu as pltpu


def _pos_emb_mlp_kernel(x_ref, pe_w1_ref, w2_ref, b2_ref, out_ref):
    """Fused [one-hot gather of (pe@w1+b1) -> SiLU -> Linear] for one batch tile.

    x_ref    : VMEM [blk, 1] int32 timestep indices
    pe_w1_ref: VMEM [T_pad, hidden] f32   (pe @ w1 + b1, resident)
    w2_ref   : VMEM [hidden, hidden] bf16 (resident)
    b2_ref   : VMEM [1, hidden] f32       (resident)
    out_ref  : VMEM [blk, hidden] f32
    """
    t_pad = pe_w1_ref.shape[0]
    blk = out_ref.shape[0]

    # One-hot MXU gather of the pre-activation rows (exact row selection).
    idx = x_ref[...]                                               # (blk, 1) i32
    tids = jax.lax.broadcasted_iota(jnp.int32, (blk, t_pad), 1)    # (blk, T_pad)
    onehot = (tids == idx).astype(pe_w1_ref.dtype)                 # (blk, T_pad)
    pre = jnp.dot(onehot, pe_w1_ref[...],
                  preferred_element_type=jnp.float32)              # (blk, hidden)

    # SiLU in f32 (EUP sigmoid), then second Linear in bf16 with f32 accum.
    h = pre * jax.nn.sigmoid(pre)
    out = jnp.dot(h.astype(w2_ref.dtype), w2_ref[...],
                  preferred_element_type=jnp.float32) + b2_ref[...]
    out_ref[...] = out.astype(out_ref.dtype)


def make_sinusoidal_table(T, d_model):
    """Reproduce the PyTorch pe construction (even d_model)."""
    # TODO(synk): the odd-d_model branch in the reference PyTorch module performs a
    # shape-inconsistent torch.cat; only even d_model is supported here.
    assert d_model % 2 == 0
    pos = jnp.arange(T, dtype=jnp.float32)
    div_term = jnp.exp(
        jnp.arange(0, d_model, 2, dtype=jnp.float32) * (-math.log(10000.0) / d_model))
    emb = pos[:, None] * div_term[None, :]
    pe = jnp.stack([jnp.sin(emb), jnp.cos(emb)], axis=-1)    # interleaved sin/cos
    return pe.reshape(T, d_model)


def position_embedding_forward(x, pe, w1, b1, w2, b2, *, block_b=256):
    """x: [B] integer timesteps.  Returns [B, 4*d_model] float32."""
    B = x.shape[0]
    T, d_model = pe.shape
    hidden = w1.shape[1]

    # Fold the first Linear into the table: gather(pe)[x] @ w1 + b1 == (pe @ w1 + b1)[x].
    pe_w1 = jnp.dot(pe.astype(w1.dtype), w1,
                    preferred_element_type=jnp.float32) + b1       # [T, hidden] f32

    # Pad T to a multiple of 128 so the one-hot contraction dim is lane-dense.
    t_pad = -(-T // 128) * 128
    if t_pad != T:
        pe_w1 = jnp.concatenate(
            [pe_w1, jnp.zeros((t_pad - T, hidden), pe_w1.dtype)], axis=0)

    # Batch tiling: pad to multiple of 8 sublanes, pick block, ensure >=2
    # parallel grid steps when the batch allows (v7x has 2 TensorCores).
    b_pad8 = max(8, -(-B // 8) * 8)
    blk = min(block_b, b_pad8)
    if b_pad8 >= 16 and (b_pad8 // blk) < 2:
        blk = -(-(b_pad8 // 2) // 8) * 8
    b_pad = -(-b_pad8 // blk) * blk
    grid_b = b_pad // blk

    x_pad = jnp.zeros((b_pad, 1), jnp.int32).at[:B, 0].set(x.astype(jnp.int32))

    def resident(shape):
        return pl.BlockSpec(shape, lambda i: (0,) * len(shape))

    flops = 2 * b_pad * t_pad * hidden + 2 * b_pad * hidden * hidden
    bytes_accessed = int(
        x_pad.size * 4 + pe_w1.size * 4
        + w2.size * w2.dtype.itemsize + b2.size * 4 + b_pad * hidden * 4)

    out = pl.pallas_call(
        _pos_emb_mlp_kernel,
        out_shape=jax.ShapeDtypeStruct((b_pad, hidden), jnp.float32),
        grid_spec=pltpu.PrefetchScalarGridSpec(
            num_scalar_prefetch=0,
            grid=(grid_b,),
            in_specs=[
                pl.BlockSpec((blk, 1), lambda i: (i, 0)),   # timestep indices
                resident((t_pad, hidden)),                  # pe@w1+b1 (resident)
                resident((hidden, hidden)),                 # w2 (bf16, resident)
                resident((1, hidden)),                      # b2
            ],
            out_specs=pl.BlockSpec((blk, hidden), lambda i: (i, 0)),
        ),
        compiler_params=pltpu.CompilerParams(
            dimension_semantics=("parallel",),
        ),
        cost_estimate=pl.CostEstimate(
            flops=flops,
            transcendentals=b_pad * hidden,
            bytes_accessed=bytes_accessed,
        ),
    )(x_pad, pe_w1, w2, b2)

    return out[:B]


def reference_forward(x, pe, w1, b1, w2, b2):
    """Pure-JAX reference with the same mixed precision as the kernel."""
    emb = pe[x.astype(jnp.int32)]
    h = jnp.dot(emb.astype(w1.dtype), w1, preferred_element_type=jnp.float32) + b1
    h = h * jax.nn.sigmoid(h)
    return jnp.dot(h.astype(w2.dtype), w2, preferred_element_type=jnp.float32) + b2


if __name__ == "__main__":
    T = 1000
    d_model = 32                 # matches the module: hidden = 4 * d_model = 128
    hidden = 4 * d_model
    B = 8

    key = jax.random.PRNGKey(0)
    k1, k2, k3, k4, kx = jax.random.split(key, 5)

    pe = make_sinusoidal_table(T, d_model)

    # Linear params stored as [in, out] (transposed vs. nn.Linear); weights bf16.
    w1 = (jax.random.normal(k1, (d_model, hidden), jnp.float32)
          * (1.0 / math.sqrt(d_model))).astype(jnp.bfloat16)
    b1 = jax.random.normal(k2, (1, hidden), jnp.float32) * 0.01
    w2 = (jax.random.normal(k3, (hidden, hidden), jnp.float32)
          * (1.0 / math.sqrt(hidden))).astype(jnp.bfloat16)
    b2 = jax.random.normal(k4, (1, hidden), jnp.float32) * 0.01

    x = jax.random.randint(kx, (B,), 0, T, dtype=jnp.int32)

    out = position_embedding_forward(x, pe, w1, b1, w2, b2)
    out = jax.block_until_ready(out)

    ref = reference_forward(x, pe, w1, b1, w2, b2)
    assert out.shape == (B, hidden)
    assert jnp.allclose(out, ref, atol=1e-2, rtol=1e-2), \
        "Pallas kernel mismatch vs JAX reference"

    print("KERNEL_OK")
</pallas_src>

<mosaic_0001>
module attributes {stable_mosaic.version = 11 : i64} {
  func.func @_pos_emb_mlp_kernel(%arg0: i32, %arg1: memref<8x1xi32, #tpu.memory_space<vmem>>, %arg2: memref<1024x128xf32, #tpu.memory_space<vmem>>, %arg3: memref<128x128xbf16, #tpu.memory_space<vmem>>, %arg4: memref<1x128xf32, #tpu.memory_space<vmem>>, %arg5: memref<8x128xf32, #tpu.memory_space<vmem>>) attributes {dimension_semantics = [#tpu.dimension_semantics<parallel>], iteration_bounds = array<i64: 1>, scalar_prefetch = 0 : i64, scratch_operands = 0 : i64, tpu.core_type = #tpu.core_type<tc>, window_params = [{transform_indices = @transform_0, window_bounds = array<i64: 8, 1>}, {pipeline_mode = #tpu.pipeline_mode<synchronous>, transform_indices = @transform_1, window_bounds = array<i64: 1024, 128>}, {pipeline_mode = #tpu.pipeline_mode<synchronous>, transform_indices = @transform_2, window_bounds = array<i64: 128, 128>}, {pipeline_mode = #tpu.pipeline_mode<synchronous>, transform_indices = @transform_3, window_bounds = array<i64: 1, 128>}, {transform_indices = @transform_4, window_bounds = array<i64: 8, 128>}]} {
    %c0 = arith.constant 0 : index
    %c0_0 = arith.constant 0 : index
    %0 = vector.load %arg1[%c0, %c0_0] : memref<8x1xi32, #tpu.memory_space<vmem>>, vector<8x1xi32>
    %1 = tpu.iota {dimensions = array<i32: 1>} : vector<8x1024xi32>
    %2 = vector.broadcast %0 : vector<8x1xi32> to vector<8x1024xi32>
    %3 = arith.cmpi eq, %1, %2 : vector<8x1024xi32>
    %4 = arith.extui %3 : vector<8x1024xi1> to vector<8x1024xi32>
    %5 = arith.sitofp %4 : vector<8x1024xi32> to vector<8x1024xf32>
    %c0_1 = arith.constant 0 : index
    %c0_2 = arith.constant 0 : index
    %6 = vector.load %arg2[%c0_1, %c0_2] : memref<1024x128xf32, #tpu.memory_space<vmem>>, vector<1024x128xf32>
    %cst = arith.constant dense<0.000000e+00> : vector<8x128xf32>
    %7 = tpu.matmul %5, %6, %cst {dimension_numbers = #tpu.dot_dimension_numbers<[1], [0], [0], [1], [0, 0, 1, 1], [], []>} : vector<8x1024xf32>, vector<1024x128xf32>, vector<8x128xf32> -> vector<8x128xf32>
    %8 = arith.negf %7 : vector<8x128xf32>
    %9 = math.exp %8 : vector<8x128xf32>
    %cst_3 = arith.constant 1.000000e+00 : f32
    %10 = vector.broadcast %cst_3 : f32 to vector<8x128xf32>
    %11 = arith.addf %10, %9 : vector<8x128xf32>
    %12 = arith.divf %10, %11 : vector<8x128xf32>
    %13 = arith.mulf %7, %12 : vector<8x128xf32>
    %14 = arith.truncf %13 : vector<8x128xf32> to vector<8x128xbf16>
    %c0_4 = arith.constant 0 : index
    %c0_5 = arith.constant 0 : index
    %15 = vector.load %arg3[%c0_4, %c0_5] : memref<128x128xbf16, #tpu.memory_space<vmem>>, vector<128x128xbf16>
    %cst_6 = arith.constant dense<0.000000e+00> : vector<8x128xf32>
    %16 = tpu.matmul %14, %15, %cst_6 {dimension_numbers = #tpu.dot_dimension_numbers<[1], [0], [0], [1], [0, 0, 1, 1], [], []>} : vector<8x128xbf16>, vector<128x128xbf16>, vector<8x128xf32> -> vector<8x128xf32>
    %c0_7 = arith.constant 0 : index
    %c0_8 = arith.constant 0 : index
    %17 = vector.load %arg4[%c0_7, %c0_8] : memref<1x128xf32, #tpu.memory_space<vmem>>, vector<1x128xf32>
    %18 = vector.broadcast %17 : vector<1x128xf32> to vector<8x128xf32>
    %19 = arith.addf %16, %18 : vector<8x128xf32>
    %c0_9 = arith.constant 0 : index
    %c0_10 = arith.constant 0 : index
    %20 = vector.load %arg5[%c0_9, %c0_10] : memref<8x128xf32, #tpu.memory_space<vmem>>, vector<8x128xf32>
    tpu.vector_store %arg5[%c0_9, %c0_10], %19 {strides = array<i32>} : memref<8x128xf32, #tpu.memory_space<vmem>>, vector<8x128xf32>,
    return
  }
  func.func @transform_0(%arg0: i32) -> (i32, i32) {
    %c0_i32 = arith.constant 0 : i32
    %c0_i32_0 = arith.constant 0 : i32
    return %arg0, %c0_i32 : i32, i32
  }
  func.func @transform_1(%arg0: i32) -> (i32, i32) {
    %c0_i32 = arith.constant 0 : i32
    %c0_i32_0 = arith.constant 0 : i32
    %c0_i32_1 = arith.constant 0 : i32
    return %c0_i32, %c0_i32_0 : i32, i32
  }
  func.func @transform_2(%arg0: i32) -> (i32, i32) {
    %c0_i32 = arith.constant 0 : i32
    %c0_i32_0 = arith.constant 0 : i32
    %c0_i32_1 = arith.constant 0 : i32
    return %c0_i32, %c0_i32_0 : i32, i32
  }
  func.func @transform_3(%arg0: i32) -> (i32, i32) {
    %c0_i32 = arith.constant 0 : i32
    %c0_i32_0 = arith.constant 0 : i32
    %c0_i32_1 = arith.constant 0 : i32
    return %c0_i32, %c0_i32_0 : i32, i32
  }
  func.func @transform_4(%arg0: i32) -> (i32, i32) {
    %c0_i32 = arith.constant 0 : i32
    %c0_i32_0 = arith.constant 0 : i32
    return %arg0, %c0_i32 : i32, i32
  }
}

</mosaic_0001>

<llo_original>
// kernel: tpu_custom_call.1
$region0: #{tpu_custom_call.1}
  #allocation0 [shape = 'u32[]', space=smem, size = 0x4, offset = 0x4, fixed_abs, tag = 'smem constant byte address 0x4 - core index']
  #allocation1 [shape = 'u32[144,128]{1,0:T(1,128)}', space=vmem, size = 0x12000, scoped, tag = 'internal scratch']
  %s0 = inlined_call_operand.vmem [shape: s32[8,1], index: 0, kind: input, shape index: {}]
  %s1 = inlined_call_operand.hbm [shape: f32[1024,128], index: 1, kind: input, shape index: {}]
  %s2 = inlined_call_operand.hbm [shape: bf16[128,128], index: 2, kind: input, shape index: {}]
  %s3 = inlined_call_operand.vmem [shape: f32[1,128], index: 3, kind: input, shape index: {}]
  %s4 = inlined_call_operand.hbm [shape: f32[8,128], index: 4, kind: output, shape index: {}]
  %s5 = sld [smem:[#allocation0]]
  $region34: #{tpu_custom_call.1} parent=0
    _
  %s7 = ssub.s32 1, %s5
  %s8 = scalar_select 0, %s7, %s5
  $region1: #{tpu_custom_call.1} parent=0
    #allocation2 [shape = 'u8[524288]{0}', space=vmem, size = 0x80000, scoped, tag = 'input window, operand 1, single buffered']
    #allocation3 [shape = 's32[1]{0}', space=sflag, size = 0x4, scoped, tag = 'scoped memory for tpu_custom_call.1']
    #allocation4 [shape = 's32[1]{0}', space=sflag, size = 0x4, scoped, tag = 'scoped memory for tpu_custom_call.1']
    #allocation5 [shape = 'u8[32768]{0}', space=vmem, size = 0x8000, scoped, tag = 'input window, operand 2, single buffered']
    #allocation6 [shape = 's32[1]{0}', space=sflag, size = 0x4, scoped, tag = 'scoped memory for tpu_custom_call.1']
    #allocation7 [shape = 'u8[4096]{0}', space=vmem, size = 0x1000, scoped, tag = 'output window, operand 0, single buffered']
    %9 = vsyncpa [#allocation3], 0
    %10 = vsyncpa [#allocation6], 0
    %11 = vsyncpa [#allocation4], 0
    // Predicated region
    $region2: #{tpu_custom_call.1} parent=1 // pred_check
      _
    $region3: #{tpu_custom_call.1} parent=1 // pred_check_branch
      %13 = sbr.rel (0) target = $region5
    $region4: #{tpu_custom_call.1} parent=1 // pred_region
      _
    $region5: #{tpu_custom_call.1} parent=1 // pred_fallthru
      _
    // Predicated region
    $region6: #{tpu_custom_call.1} parent=1 // pred_check
      _
    $region7: #{tpu_custom_call.1} parent=1 // pred_check_branch
      %15 = sbr.rel (0) target = $region9
    $region8: #{tpu_custom_call.1} parent=1 // pred_region
      %s17 = ssub.s32 16384, 16384
      %18 = vsyncadd [#allocation3], %s17
      %s19 = sshll.u32 [#allocation2], 4
      %s20 = int_to_ptr.vmem [resolvable:$true] %s19
      %25 = dma.hbm_to_vmem [thread:$0]  %s1, 16384, %s20, [#allocation3], 128, 128, 8
    $region9: #{tpu_custom_call.1} parent=1 // pred_fallthru
      _
    // Predicated region
    $region10: #{tpu_custom_call.1} parent=1 // pred_check
      _
    $region11: #{tpu_custom_call.1} parent=1 // pred_check_branch
      %27 = sbr.rel (0) target = $region13
    $region12: #{tpu_custom_call.1} parent=1 // pred_region
      %s29 = ssub.s32 1024, 1024
      %30 = vsyncadd [#allocation6], %s29
      %s31 = sshll.u32 [#allocation5], 4
      %s32 = int_to_ptr.vmem [resolvable:$true] %s31
      %37 = dma.hbm_to_vmem [thread:$0]  %s2, 1024, %s32, [#allocation6], 64, 64, 4
    $region13: #{tpu_custom_call.1} parent=1 // pred_fallthru
      _
    // Predicated region
    $region14: #{tpu_custom_call.1} parent=1 // pred_check
      _
    $region15: #{tpu_custom_call.1} parent=1 // pred_check_branch
      %39 = sbr.rel (0) target = $region17
    $region16: #{tpu_custom_call.1} parent=1 // pred_region
      _
    $region17: #{tpu_custom_call.1} parent=1 // pred_fallthru
      _
    // Predicated region
    $region18: #{tpu_custom_call.1} parent=1 // pred_check
      _
    $region19: #{tpu_custom_call.1} parent=1 // pred_check_branch
      %41 = sbr.rel (0) target = $region21
    $region20: #{tpu_custom_call.1} parent=1 // pred_region
      %42 = dma.done [#allocation3], 16384
    $region21: #{tpu_custom_call.1} parent=1 // pred_fallthru
      _
    // Predicated region
    $region22: #{tpu_custom_call.1} parent=1 // pred_check
      _
    $region23: #{tpu_custom_call.1} parent=1 // pred_check_branch
      %44 = sbr.rel (0) target = $region25
    $region24: #{tpu_custom_call.1} parent=1 // pred_region
      %45 = dma.done [#allocation6], 1024
    $region25: #{tpu_custom_call.1} parent=1 // pred_fallthru
      _
    %v47 = vld [vmem:[%s0] sm:$0xff]
    %v48 = vlaneseq
    %v49 = vand.u32 %v48, 127
    %v50 = vadd.s32 %v49, 128
    %v51 = vadd.s32 %v49, 256
    %v52 = vadd.s32 %v49, 384
    %v53 = vadd.s32 %v49, 512
    %v54 = vadd.s32 %v49, 640
    %v55 = vadd.s32 %v49, 768
    %v56 = vadd.s32 %v49, 896
    %57 = vset.pattern.permute.xlu0 0
    %58 = vperm.xlu0 %57, %v47
    %v59 = vpop.permute.xlu0 %58
    %vm60 = vcmp.eq.s32.totalorder %v49, %v59
    %vm61 = vcmp.eq.s32.totalorder %v50, %v59
    %vm62 = vcmp.eq.s32.totalorder %v51, %v59
    %vm63 = vcmp.eq.s32.totalorder %v52, %v59
    %vm64 = vcmp.eq.s32.totalorder %v53, %v59
    %vm65 = vcmp.eq.s32.totalorder %v54, %v59
    %vm66 = vcmp.eq.s32.totalorder %v55, %v59
    %vm67 = vcmp.eq.s32.totalorder %v56, %v59
    %v68 = vsel %vm60, 1, 0
    %v69 = vsel %vm61, 1, 0
    %v70 = vsel %vm62, 1, 0
    %v71 = vsel %vm63, 1, 0
    %v72 = vsel %vm64, 1, 0
    %v73 = vsel %vm65, 1, 0
    %v74 = vsel %vm66, 1, 0
    %v75 = vsel %vm67, 1, 0
    %v76 = vcvt.s32.f32 %v68
    %v77 = vcvt.s32.f32 %v69
    %v78 = vcvt.s32.f32 %v70
    %v79 = vcvt.s32.f32 %v71
    %v80 = vcvt.s32.f32 %v72
    %v81 = vcvt.s32.f32 %v73
    %v82 = vcvt.s32.f32 %v74
    %v83 = vcvt.s32.f32 %v75
    %v84 = vld [vmem:[#allocation2] sm:$0xff]
    %v85 = vld [vmem:[#allocation2 + $0x8] sm:$0xff]
    %v86 = vld [vmem:[#allocation2 + $0x10] sm:$0xff]
    %v87 = vld [vmem:[#allocation2 + $0x18] sm:$0xff]
    %v88 = vld [vmem:[#allocation2 + $0x20] sm:$0xff]
    %v89 = vld [vmem:[#allocation2 + $0x28] sm:$0xff]
    %v90 = vld [vmem:[#allocation2 + $0x30] sm:$0xff]
    %v91 = vld [vmem:[#allocation2 + $0x38] sm:$0xff]
    %v92 = vld [vmem:[#allocation2 + $0x40] sm:$0xff]
    %v93 = vld [vmem:[#allocation2 + $0x48] sm:$0xff]
    %v94 = vld [vmem:[#allocation2 + $0x50] sm:$0xff]
    %v95 = vld [vmem:[#allocation2 + $0x58] sm:$0xff]
    %v96 = vld [vmem:[#allocation2 + $0x60] sm:$0xff]
    %v97 = vld [vmem:[#allocation2 + $0x68] sm:$0xff]
    %v98 = vld [vmem:[#allocation2 + $0x70] sm:$0xff]
    %v99 = vld [vmem:[#allocation2 + $0x78] sm:$0xff]
    %v100 = vld [vmem:[#allocation2 + $0x80] sm:$0xff]
    %v101 = vld [vmem:[#allocation2 + $0x88] sm:$0xff]
    %v102 = vld [vmem:[#allocation2 + $0x90] sm:$0xff]
    %v103 = vld [vmem:[#allocation2 + $0x98] sm:$0xff]
    %v104 = vld [vmem:[#allocation2 + $0xa0] sm:$0xff]
    %v105 = vld [vmem:[#allocation2 + $0xa8] sm:$0xff]
    %v106 = vld [vmem:[#allocation2 + $0xb0] sm:$0xff]
    %v107 = vld [vmem:[#allocation2 + $0xb8] sm:$0xff]
    %v108 = vld [vmem:[#allocation2 + $0xc0] sm:$0xff]
    %v109 = vld [vmem:[#allocation2 + $0xc8] sm:$0xff]
    %v110 = vld [vmem:[#allocation2 + $0xd0] sm:$0xff]
    %v111 = vld [vmem:[#allocation2 + $0xd8] sm:$0xff]
    %v112 = vld [vmem:[#allocation2 + $0xe0] sm:$0xff]
    %v113 = vld [vmem:[#allocation2 + $0xe8] sm:$0xff]
    %v114 = vld [vmem:[#allocation2 + $0xf0] sm:$0xff]
    %v115 = vld [vmem:[#allocation2 + $0xf8] sm:$0xff]
    %v116 = vld [vmem:[#allocation2 + $0x100] sm:$0xff]
    %v117 = vld [vmem:[#allocation2 + $0x108] sm:$0xff]
    %v118 = vld [vmem:[#allocation2 + $0x110] sm:$0xff]
    %v119 = vld [vmem:[#allocation2 + $0x118] sm:$0xff]
    %v120 = vld [vmem:[#allocation2 + $0x120] sm:$0xff]
    %v121 = vld [vmem:[#allocation2 + $0x128] sm:$0xff]
    %v122 = vld [vmem:[#allocation2 + $0x130] sm:$0xff]
    %v123 = vld [vmem:[#allocation2 + $0x138] sm:$0xff]
    %v124 = vld [vmem:[#allocation2 + $0x140] sm:$0xff]
    %v125 = vld [vmem:[#allocation2 + $0x148] sm:$0xff]
    %v126 = vld [vmem:[#allocation2 + $0x150] sm:$0xff]
    %v127 = vld [vmem:[#allocation2 + $0x158] sm:$0xff]
    %v128 = vld [vmem:[#allocation2 + $0x160] sm:$0xff]
    %v129 = vld [vmem:[#allocation2 + $0x168] sm:$0xff]
    %v130 = vld [vmem:[#allocation2 + $0x170] sm:$0xff]
    %v131 = vld [vmem:[#allocation2 + $0x178] sm:$0xff]
    %v132 = vld [vmem:[#allocation2 + $0x180] sm:$0xff]
    %v133 = vld [vmem:[#allocation2 + $0x188] sm:$0xff]
    %v134 = vld [vmem:[#allocation2 + $0x190] sm:$0xff]
    %v135 = vld [vmem:[#allocation2 + $0x198] sm:$0xff]
    %v136 = vld [vmem:[#allocation2 + $0x1a0] sm:$0xff]
    %v137 = vld [vmem:[#allocation2 + $0x1a8] sm:$0xff]
    %v138 = vld [vmem:[#allocation2 + $0x1b0] sm:$0xff]
    %v139 = vld [vmem:[#allocation2 + $0x1b8] sm:$0xff]
    %v140 = vld [vmem:[#allocation2 + $0x1c0] sm:$0xff]
    %v141 = vld [vmem:[#allocation2 + $0x1c8] sm:$0xff]
    %v142 = vld [vmem:[#allocation2 + $0x1d0] sm:$0xff]
    %v143 = vld [vmem:[#allocation2 + $0x1d8] sm:$0xff]
    %v144 = vld [vmem:[#allocation2 + $0x1e0] sm:$0xff]
    %v145 = vld [vmem:[#allocation2 + $0x1e8] sm:$0xff]
    %v146 = vld [vmem:[#allocation2 + $0x1f0] sm:$0xff]
    %v147 = vld [vmem:[#allocation2 + $0x1f8] sm:$0xff]
    %v148 = vld [vmem:[#allocation2 + $0x200] sm:$0xff]
    %v149 = vld [vmem:[#allocation2 + $0x208] sm:$0xff]
    %v150 = vld [vmem:[#allocation2 + $0x210] sm:$0xff]
    %v151 = vld [vmem:[#allocation2 + $0x218] sm:$0xff]
    %v152 = vld [vmem:[#allocation2 + $0x220] sm:$0xff]
    %v153 = vld [vmem:[#allocation2 + $0x228] sm:$0xff]
    %v154 = vld [vmem:[#allocation2 + $0x230] sm:$0xff]
    %v155 = vld [vmem:[#allocation2 + $0x238] sm:$0xff]
    %v156 = vld [vmem:[#allocation2 + $0x240] sm:$0xff]
    %v157 = vld [vmem:[#allocation2 + $0x248] sm:$0xff]
    %v158 = vld [vmem:[#allocation2 + $0x250] sm:$0xff]
    %v159 = vld [vmem:[#allocation2 + $0x258] sm:$0xff]
    %v160 = vld [vmem:[#allocation2 + $0x260] sm:$0xff]
    %v161 = vld [vmem:[#allocation2 + $0x268] sm:$0xff]
    %v162 = vld [vmem:[#allocation2 + $0x270] sm:$0xff]
    %v163 = vld [vmem:[#allocation2 + $0x278] sm:$0xff]
    %v164 = vld [vmem:[#allocation2 + $0x280] sm:$0xff]
    %v165 = vld [vmem:[#allocation2 + $0x288] sm:$0xff]
    %v166 = vld [vmem:[#allocation2 + $0x290] sm:$0xff]
    %v167 = vld [vmem:[#allocation2 + $0x298] sm:$0xff]
    %v168 = vld [vmem:[#allocation2 + $0x2a0] sm:$0xff]
    %v169 = vld [vmem:[#allocation2 + $0x2a8] sm:$0xff]
    %v170 = vld [vmem:[#allocation2 + $0x2b0] sm:$0xff]
    %v171 = vld [vmem:[#allocation2 + $0x2b8] sm:$0xff]
    %v172 = vld [vmem:[#allocation2 + $0x2c0] sm:$0xff]
    %v173 = vld [vmem:[#allocation2 + $0x2c8] sm:$0xff]
    %v174 = vld [vmem:[#allocation2 + $0x2d0] sm:$0xff]
    %v175 = vld [vmem:[#allocation2 + $0x2d8] sm:$0xff]
    %v176 = vld [vmem:[#allocation2 + $0x2e0] sm:$0xff]
    %v177 = vld [vmem:[#allocation2 + $0x2e8] sm:$0xff]
    %v178 = vld [vmem:[#allocation2 + $0x2f0] sm:$0xff]
    %v179 = vld [vmem:[#allocation2 + $0x2f8] sm:$0xff]
    %v180 = vld [vmem:[#allocation2 + $0x300] sm:$0xff]
    %v181 = vld [vmem:[#allocation2 + $0x308] sm:$0xff]
    %v182 = vld [vmem:[#allocation2 + $0x310] sm:$0xff]
    %v183 = vld [vmem:[#allocation2 + $0x318] sm:$0xff]
    %v184 = vld [vmem:[#allocation2 + $0x320] sm:$0xff]
    %v185 = vld [vmem:[#allocation2 + $0x328] sm:$0xff]
    %v186 = vld [vmem:[#allocation2 + $0x330] sm:$0xff]
    %v187 = vld [vmem:[#allocation2 + $0x338] sm:$0xff]
    %v188 = vld [vmem:[#allocation2 + $0x340] sm:$0xff]
    %v189 = vld [vmem:[#allocation2 + $0x348] sm:$0xff]
    %v190 = vld [vmem:[#allocation2 + $0x350] sm:$0xff]
    %v191 = vld [vmem:[#allocation2 + $0x358] sm:$0xff]
    %v192 = vld [vmem:[#allocation2 + $0x360] sm:$0xff]
    %v193 = vld [vmem:[#allocation2 + $0x368] sm:$0xff]
    %v194 = vld [vmem:[#allocation2 + $0x370] sm:$0xff]
    %v195 = vld [vmem:[#allocation2 + $0x378] sm:$0xff]
    %v196 = vld [vmem:[#allocation2 + $0x380] sm:$0xff]
    %v197 = vld [vmem:[#allocation2 + $0x388] sm:$0xff]
    %v198 = vld [vmem:[#allocation2 + $0x390] sm:$0xff]
    %v199 = vld [vmem:[#allocation2 + $0x398] sm:$0xff]
    %v200 = vld [vmem:[#allocation2 + $0x3a0] sm:$0xff]
    %v201 = vld [vmem:[#allocation2 + $0x3a8] sm:$0xff]
    %v202 = vld [vmem:[#allocation2 + $0x3b0] sm:$0xff]
    %v203 = vld [vmem:[#allocation2 + $0x3b8] sm:$0xff]
    %v204 = vld [vmem:[#allocation2 + $0x3c0] sm:$0xff]
    %v205 = vld [vmem:[#allocation2 + $0x3c8] sm:$0xff]
    %v206 = vld [vmem:[#allocation2 + $0x3d0] sm:$0xff]
    %v207 = vld [vmem:[#allocation2 + $0x3d8] sm:$0xff]
    %v208 = vld [vmem:[#allocation2 + $0x3e0] sm:$0xff]
    %v209 = vld [vmem:[#allocation2 + $0x3e8] sm:$0xff]
    %v210 = vld [vmem:[#allocation2 + $0x3f0] sm:$0xff]
    %v211 = vld [vmem:[#allocation2 + $0x3f8] sm:$0xff]
    %212 = vmatprep.subr.mxu0 0.0
    %213 = vmatpush1.msra.mxu0 %v84
    %214 = vmatprep.subr.mxu0 0.0
    %215 = vmatpush1.msra.mxu0 %v85
    %216 = vmatprep.subr.mxu0 0.0
    %217 = vmatpush1.msra.mxu0 %v86
    %218 = vmatprep.subr.mxu0 0.0
    %219 = vmatpush1.msra.mxu0 %v87
    %220 = vmatprep.subr.mxu0 0.0
    %221 = vmatpush1.msra.mxu0 %v88
    %222 = vmatprep.subr.mxu0 0.0
    %223 = vmatpush1.msra.mxu0 %v89
    %224 = vmatprep.subr.mxu0 0.0
    %225 = vmatpush1.msra.mxu0 %v90
    %226 = vmatprep.subr.mxu0 0.0
    %227 = vmatpush1.msra.mxu0 %v91
    %228 = vmatprep.subr.mxu0 0.0
    %229 = vmatpush1.msra.mxu0 %v92
    %230 = vmatprep.subr.mxu0 0.0
    %231 = vmatpush1.msra.mxu0 %v93
    %232 = vmatprep.subr.mxu0 0.0
    %233 = vmatpush1.msra.mxu0 %v94
    %234 = vmatprep.subr.mxu0 0.0
    %235 = vmatpush1.msra.mxu0 %v95
    %236 = vmatprep.subr.mxu0 0.0
    %237 = vmatpush1.msra.mxu0 %v96
    %238 = vmatprep.subr.mxu0 0.0
    %239 = vmatpush1.msra.mxu0 %v97
    %240 = vmatprep.subr.mxu0 0.0
    %241 = vmatpush1.msra.mxu0 %v98
    %242 = vmatprep.subr.mxu0 0.0
    %243 = vmatpush1.msra.mxu0 %v99
    %244 = vmatprep.subr.mxu0 0.0
    %245 = vmatpush1.msra.mxu0 %v100
    %246 = vmatprep.subr.mxu0 0.0
    %247 = vmatpush1.msra.mxu0 %v101
    %248 = vmatprep.subr.mxu0 0.0
    %249 = vmatpush1.msra.mxu0 %v102
    %250 = vmatprep.subr.mxu0 0.0
    %251 = vmatpush1.msra.mxu0 %v103
    %252 = vmatprep.subr.mxu0 0.0
    %253 = vmatpush1.msra.mxu0 %v104
    %254 = vmatprep.subr.mxu0 0.0
    %255 = vmatpush1.msra.mxu0 %v105
    %256 = vmatprep.subr.mxu0 0.0
    %257 = vmatpush1.msra.mxu0 %v106
    %258 = vmatprep.subr.mxu0 0.0
    %259 = vmatpush1.msra.mxu0 %v107
    %260 = vmatprep.subr.mxu0 0.0
    %261 = vmatpush1.msra.mxu0 %v108
    %262 = vmatprep.subr.mxu0 0.0
    %263 = vmatpush1.msra.mxu0 %v109
    %264 = vmatprep.subr.mxu0 0.0
    %265 = vmatpush1.msra.mxu0 %v110
    %266 = vmatprep.subr.mxu0 0.0
    %267 = vmatpush1.msra.mxu0 %v111
    %268 = vmatprep.subr.mxu0 0.0
    %269 = vmatpush1.msra.mxu0 %v112
    %270 = vmatprep.subr.mxu0 0.0
    %271 = vmatpush1.msra.mxu0 %v113
    %272 = vmatprep.subr.mxu0 0.0
    %273 = vmatpush1.msra.mxu0 %v114
    %274 = vmatprep.subr.mxu0 0.0
    %275 = vmatpush1.msra.mxu0 %v115
    %276 = vmatprep.mubr.f32.mxu0 %v77
    %277 = vmatmul.mubr.f32.gmra.mrb[0].mxu0 %v76
    %v278 = vpop.f32.mrb[0].mxu0
    %v279 = vadd.f32 0.0, %v278
    %v280 = vpop.f32.mrb[0].mxu0
    %281 = vdwg.mxu0
    %282 = vmatprep.subr.mxu0 0.0
    %283 = vmatpush1.msra.mxu0 %v116
    %284 = vmatprep.subr.mxu0 0.0
    %285 = vmatpush1.msra.mxu0 %v117
    %286 = vmatprep.subr.mxu0 0.0
    %287 = vmatpush1.msra.mxu0 %v118
    %288 = vmatprep.subr.mxu0 0.0
    %289 = vmatpush1.msra.mxu0 %v119
    %290 = vmatprep.subr.mxu0 0.0
    %291 = vmatpush1.msra.mxu0 %v120
    %292 = vmatprep.subr.mxu0 0.0
    %293 = vmatpush1.msra.mxu0 %v121
    %294 = vmatprep.subr.mxu0 0.0
    %295 = vmatpush1.msra.mxu0 %v122
    %296 = vmatprep.subr.mxu0 0.0
    %297 = vmatpush1.msra.mxu0 %v123
    %298 = vmatprep.subr.mxu0 0.0
    %299 = vmatpush1.msra.mxu0 %v124
    %300 = vmatprep.subr.mxu0 0.0
    %301 = vmatpush1.msra.mxu0 %v125
    %302 = vmatprep.subr.mxu0 0.0
    %303 = vmatpush1.msra.mxu0 %v126
    %304 = vmatprep.subr.mxu0 0.0
    %305 = vmatpush1.msra.mxu0 %v127
    %306 = vmatprep.subr.mxu0 0.0
    %307 = vmatpush1.msra.mxu0 %v128
    %308 = vmatprep.subr.mxu0 0.0
    %309 = vmatpush1.msra.mxu0 %v129
    %310 = vmatprep.subr.mxu0 0.0
    %311 = vmatpush1.msra.mxu0 %v130
    %312 = vmatprep.subr.mxu0 0.0
    %313 = vmatpush1.msra.mxu0 %v131
    %314 = vmatprep.subr.mxu0 0.0
    %315 = vmatpush1.msra.mxu0 %v132
    %316 = vmatprep.subr.mxu0 0.0
    %317 = vmatpush1.msra.mxu0 %v133
    %318 = vmatprep.subr.mxu0 0.0
    %319 = vmatpush1.msra.mxu0 %v134
    %320 = vmatprep.subr.mxu0 0.0
    %321 = vmatpush1.msra.mxu0 %v135
    %322 = vmatprep.subr.mxu0 0.0
    %323 = vmatpush1.msra.mxu0 %v136
    %324 = vmatprep.subr.mxu0 0.0
    %325 = vmatpush1.msra.mxu0 %v137
    %326 = vmatprep.subr.mxu0 0.0
    %327 = vmatpush1.msra.mxu0 %v138
    %328 = vmatprep.subr.mxu0 0.0
    %329 = vmatpush1.msra.mxu0 %v139
    %330 = vmatprep.subr.mxu0 0.0
    %331 = vmatpush1.msra.mxu0 %v140
    %332 = vmatprep.subr.mxu0 0.0
    %333 = vmatpush1.msra.mxu0 %v141
    %334 = vmatprep.subr.mxu0 0.0
    %335 = vmatpush1.msra.mxu0 %v142
    %336 = vmatprep.subr.mxu0 0.0
    %337 = vmatpush1.msra.mxu0 %v143
    %338 = vmatprep.subr.mxu0 0.0
    %339 = vmatpush1.msra.mxu0 %v144
    %340 = vmatprep.subr.mxu0 0.0
    %341 = vmatpush1.msra.mxu0 %v145
    %342 = vmatprep.subr.mxu0 0.0
    %343 = vmatpush1.msra.mxu0 %v146
    %344 = vmatprep.subr.mxu0 0.0
    %345 = vmatpush1.msra.mxu0 %v147
    %346 = vmatprep.mubr.f32.mxu0 %v79
    %347 = vmatmul.mubr.f32.gmra.mrb[0].mxu0 %v78
    %v348 = vpop.f32.mrb[0].mxu0
    %v349 = vadd.f32 %v279, %v348
    %v350 = vpop.f32.mrb[0].mxu0
    %351 = vdwg.mxu0
    %352 = vmatprep.subr.mxu0 0.0
    %353 = vmatpush1.msra.mxu0 %v148
    %354 = vmatprep.subr.mxu0 0.0
    %355 = vmatpush1.msra.mxu0 %v149
    %356 = vmatprep.subr.mxu0 0.0
    %357 = vmatpush1.msra.mxu0 %v150
    %358 = vmatprep.subr.mxu0 0.0
    %359 = vmatpush1.msra.mxu0 %v151
    %360 = vmatprep.subr.mxu0 0.0
    %361 = vmatpush1.msra.mxu0 %v152
    %362 = vmatprep.subr.mxu0 0.0
    %363 = vmatpush1.msra.mxu0 %v153
    %364 = vmatprep.subr.mxu0 0.0
    %365 = vmatpush1.msra.mxu0 %v154
    %366 = vmatprep.subr.mxu0 0.0
    %367 = vmatpush1.msra.mxu0 %v155
    %368 = vmatprep.subr.mxu0 0.0
    %369 = vmatpush1.msra.mxu0 %v156
    %370 = vmatprep.subr.mxu0 0.0
    %371 = vmatpush1.msra.mxu0 %v157
    %372 = vmatprep.subr.mxu0 0.0
    %373 = vmatpush1.msra.mxu0 %v158
    %374 = vmatprep.subr.mxu0 0.0
    %375 = vmatpush1.msra.mxu0 %v159
    %376 = vmatprep.subr.mxu0 0.0
    %377 = vmatpush1.msra.mxu0 %v160
    %378 = vmatprep.subr.mxu0 0.0
    %379 = vmatpush1.msra.mxu0 %v161
    %380 = vmatprep.subr.mxu0 0.0
    %381 = vmatpush1.msra.mxu0 %v162
    %382 = vmatprep.subr.mxu0 0.0
    %383 = vmatpush1.msra.mxu0 %v163
    %384 = vmatprep.subr.mxu0 0.0
    %385 = vmatpush1.msra.mxu0 %v164
    %386 = vmatprep.subr.mxu0 0.0
    %387 = vmatpush1.msra.mxu0 %v165
    %388 = vmatprep.subr.mxu0 0.0
    %389 = vmatpush1.msra.mxu0 %v166
    %390 = vmatprep.subr.mxu0 0.0
    %391 = vmatpush1.msra.mxu0 %v167
    %392 = vmatprep.subr.mxu0 0.0
    %393 = vmatpush1.msra.mxu0 %v168
    %394 = vmatprep.subr.mxu0 0.0
    %395 = vmatpush1.msra.mxu0 %v169
    %396 = vmatprep.subr.mxu0 0.0
    %397 = vmatpush1.msra.mxu0 %v170
    %398 = vmatprep.subr.mxu0 0.0
    %399 = vmatpush1.msra.mxu0 %v171
    %400 = vmatprep.subr.mxu0 0.0
    %401 = vmatpush1.msra.mxu0 %v172
    %402 = vmatprep.subr.mxu0 0.0
    %403 = vmatpush1.msra.mxu0 %v173
    %404 = vmatprep.subr.mxu0 0.0
    %405 = vmatpush1.msra.mxu0 %v174
    %406 = vmatprep.subr.mxu0 0.0
    %407 = vmatpush1.msra.mxu0 %v175
    %408 = vmatprep.subr.mxu0 0.0
    %409 = vmatpush1.msra.mxu0 %v176
    %410 = vmatprep.subr.mxu0 0.0
    %411 = vmatpush1.msra.mxu0 %v177
    %412 = vmatprep.subr.mxu0 0.0
    %413 = vmatpush1.msra.mxu0 %v178
    %414 = vmatprep.subr.mxu0 0.0
    %415 = vmatpush1.msra.mxu0 %v179
    %416 = vmatprep.mubr.f32.mxu0 %v81
    %417 = vmatmul.mubr.f32.gmra.mrb[0].mxu0 %v80
    %v418 = vpop.f32.mrb[0].mxu0
    %v419 = vadd.f32 %v349, %v418
    %v420 = vpop.f32.mrb[0].mxu0
    %421 = vdwg.mxu0
    %422 = vmatprep.subr.mxu0 0.0
    %423 = vmatpush1.msra.mxu0 %v180
    %424 = vmatprep.subr.mxu0 0.0
    %425 = vmatpush1.msra.mxu0 %v181
    %426 = vmatprep.subr.mxu0 0.0
    %427 = vmatpush1.msra.mxu0 %v182
    %428 = vmatprep.subr.mxu0 0.0
    %429 = vmatpush1.msra.mxu0 %v183
    %430 = vmatprep.subr.mxu0 0.0
    %431 = vmatpush1.msra.mxu0 %v184
    %432 = vmatprep.subr.mxu0 0.0
    %433 = vmatpush1.msra.mxu0 %v185
    %434 = vmatprep.subr.mxu0 0.0
    %435 = vmatpush1.msra.mxu0 %v186
    %436 = vmatprep.subr.mxu0 0.0
    %437 = vmatpush1.msra.mxu0 %v187
    %438 = vmatprep.subr.mxu0 0.0
    %439 = vmatpush1.msra.mxu0 %v188
    %440 = vmatprep.subr.mxu0 0.0
    %441 = vmatpush1.msra.mxu0 %v189
    %442 = vmatprep.subr.mxu0 0.0
    %443 = vmatpush1.msra.mxu0 %v190
    %444 = vmatprep.subr.mxu0 0.0
    %445 = vmatpush1.msra.mxu0 %v191
    %446 = vmatprep.subr.mxu0 0.0
    %447 = vmatpush1.msra.mxu0 %v192
    %448 = vmatprep.subr.mxu0 0.0
    %449 = vmatpush1.msra.mxu0 %v193
    %450 = vmatprep.subr.mxu0 0.0
    %451 = vmatpush1.msra.mxu0 %v194
    %452 = vmatprep.subr.mxu0 0.0
    %453 = vmatpush1.msra.mxu0 %v195
    %454 = vmatprep.subr.mxu0 0.0
    %455 = vmatpush1.msra.mxu0 %v196
    %456 = vmatprep.subr.mxu0 0.0
    %457 = vmatpush1.msra.mxu0 %v197
    %458 = vmatprep.subr.mxu0 0.0
    %459 = vmatpush1.msra.mxu0 %v198
    %460 = vmatprep.subr.mxu0 0.0
    %461 = vmatpush1.msra.mxu0 %v199
    %462 = vmatprep.subr.mxu0 0.0
    %463 = vmatpush1.msra.mxu0 %v200
    %464 = vmatprep.subr.mxu0 0.0
    %465 = vmatpush1.msra.mxu0 %v201
    %466 = vmatprep.subr.mxu0 0.0
    %467 = vmatpush1.msra.mxu0 %v202
    %468 = vmatprep.subr.mxu0 0.0
    %469 = vmatpush1.msra.mxu0 %v203
    %470 = vmatprep.subr.mxu0 0.0
    %471 = vmatpush1.msra.mxu0 %v204
    %472 = vmatprep.subr.mxu0 0.0
    %473 = vmatpush1.msra.mxu0 %v205
    %474 = vmatprep.subr.mxu0 0.0
    %475 = vmatpush1.msra.mxu0 %v206
    %476 = vmatprep.subr.mxu0 0.0
    %477 = vmatpush1.msra.mxu0 %v207
    %478 = vmatprep.subr.mxu0 0.0
    %479 = vmatpush1.msra.mxu0 %v208
    %480 = vmatprep.subr.mxu0 0.0
    %481 = vmatpush1.msra.mxu0 %v209
    %482 = vmatprep.subr.mxu0 0.0
    %483 = vmatpush1.msra.mxu0 %v210
    %484 = vmatprep.subr.mxu0 0.0
    %485 = vmatpush1.msra.mxu0 %v211
    %486 = vmatprep.mubr.f32.mxu0 %v83
    %487 = vmatmul.mubr.f32.gmra.mrb[0].mxu0 %v82
    %v488 = vpop.f32.mrb[0].mxu0
    %v489 = vadd.f32 %v419, %v488
    %v490 = vpop.f32.mrb[0].mxu0
    %491 = vdwg.mxu0
    %v492 = vxor.u32 %v489, 2147483648
    %v493 = vmul.f32 %v492, 1.442695
    %v494 = vpow.pop %v493
    %v495 = vadd.f32 %v494, 1.0
    %v496 = vrcp.pop %v495
    %v497 = vmul.f32 1.0, %v496
    %v498 = vmul.f32 %v489, %v497
    %v499 = vpack.c.bf16 %v498, %v498
    %v500 = vld [vmem:[#allocation5] sm:$0xf]
    %v501 = vld [vmem:[#allocation5 + $0x4] sm:$0xf]
    %v502 = vld [vmem:[#allocation5 + $0x8] sm:$0xf]
    %v503 = vld [vmem:[#allocation5 + $0xc] sm:$0xf]
    %v504 = vld [vmem:[#allocation5 + $0x10] sm:$0xf]
    %v505 = vld [vmem:[#allocation5 + $0x14] sm:$0xf]
    %v506 = vld [vmem:[#allocation5 + $0x18] sm:$0xf]
    %v507 = vld [vmem:[#allocation5 + $0x1c] sm:$0xf]
    %v508 = vld [vmem:[#allocation5 + $0x20] sm:$0xf]
    %v509 = vld [vmem:[#allocation5 + $0x24] sm:$0xf]
    %v510 = vld [vmem:[#allocation5 + $0x28] sm:$0xf]
    %v511 = vld [vmem:[#allocation5 + $0x2c] sm:$0xf]
    %v512 = vld [vmem:[#allocation5 + $0x30] sm:$0xf]
    %v513 = vld [vmem:[#allocation5 + $0x34] sm:$0xf]
    %v514 = vld [vmem:[#allocation5 + $0x38] sm:$0xf]
    %v515 = vld [vmem:[#allocation5 + $0x3c] sm:$0xf]
    %v516 = vld [vmem:[%s3] sm:$0x1]
    %v518 = vlaneseq
    %v519 = vshrl.u32 %v518, 7
    %v520 = vsub.s32 0, %v519
    %v521 = vrot.slane %v516, %v520
    %v539 = vunpack.c.l.b16 %v500
    %v540 = vunpack.c.l.b16 %v501
    %v541 = vunpack.c.l.b16 %v502
    %v542 = vunpack.c.l.b16 %v503
    %v543 = vunpack.c.l.b16 %v504
    %v544 = vunpack.c.l.b16 %v505
    %v545 = vunpack.c.l.b16 %v506
    %v546 = vunpack.c.l.b16 %v507
    %v547 = vunpack.c.l.b16 %v508
    %v548 = vunpack.c.l.b16 %v509
    %v549 = vunpack.c.l.b16 %v510
    %v550 = vunpack.c.l.b16 %v511
    %v551 = vunpack.c.l.b16 %v512
    %v552 = vunpack.c.l.b16 %v513
    %v553 = vunpack.c.l.b16 %v514
    %v554 = vunpack.c.l.b16 %v515
    %v555 = vpack.c.b16 %v540, %v539
    %v556 = vpack.c.b16 %v542, %v541
    %v557 = vpack.c.b16 %v544, %v543
    %v558 = vpack.c.b16 %v546, %v545
    %v559 = vpack.c.b16 %v548, %v547
    %v560 = vpack.c.b16 %v550, %v549
    %v561 = vpack.c.b16 %v552, %v551
    %v562 = vpack.c.b16 %v554, %v553
    %571 = vmatprep.subr.bf16.mxu0 0
    %572 = vmatpush1.bf16.msra.mxu0 %v555
    %573 = vmatprep.subr.bf16.mxu0 0
    %574 = vmatpush1.bf16.msra.mxu0 %v556
    %575 = vmatprep.subr.bf16.mxu0 0
    %576 = vmatpush1.bf16.msra.mxu0 %v557
    %577 = vmatprep.subr.bf16.mxu0 0
    %578 = vmatpush1.bf16.msra.mxu0 %v558
    %579 = vmatprep.subr.bf16.mxu0 0
    %580 = vmatpush1.bf16.msra.mxu0 %v559
    %581 = vmatprep.subr.bf16.mxu0 0
    %582 = vmatpush1.bf16.msra.mxu0 %v560
    %583 = vmatprep.subr.bf16.mxu0 0
    %584 = vmatpush1.bf16.msra.mxu0 %v561
    %585 = vmatprep.subr.bf16.mxu0 0
    %586 = vmatpush1.bf16.msra.mxu0 %v562
    %587 = vmatprep.subr.bf16.mxu0 0
    %588 = vmatpush1.bf16.msra.mxu0 0
    %589 = vmatprep.subr.bf16.mxu0 0
    %590 = vmatpush1.bf16.msra.mxu0 0
    %591 = vmatprep.subr.bf16.mxu0 0
    %592 = vmatpush1.bf16.msra.mxu0 0
    %593 = vmatprep.subr.bf16.mxu0 0
    %594 = vmatpush1.bf16.msra.mxu0 0
    %595 = vmatprep.subr.bf16.mxu0 0
    %596 = vmatpush1.bf16.msra.mxu0 0
    %597 = vmatprep.subr.bf16.mxu0 0
    %598 = vmatpush1.bf16.msra.mxu0 0
    %599 = vmatprep.subr.bf16.mxu0 0
    %600 = vmatpush1.bf16.msra.mxu0 0
    %601 = vmatprep.subr.bf16.mxu0 0
    %602 = vmatpush1.bf16.msra.mxu0 0
    %603 = vmatprep.mubr.bf16.mxu0 0
    %604 = vmatmul.mubr.bf16.gmra.mrb[0].mxu0 %v499
    %v605 = vpop.f32.mrb[0].mxu0
    %v606 = vadd.f32 %v521, %v605
    %v607 = vpop.f32.mrb[0].mxu0
    %v608 = vpop.f32.mrb[0].mxu0
    %v609 = vpop.f32.mrb[0].mxu0
    %610 = vdwg.mxu0
    %611 = vst [vmem:[#allocation7] sm:$0xff] %v606
    // Predicated region
    $region26: #{tpu_custom_call.1} parent=1 // pred_check
      _
    $region27: #{tpu_custom_call.1} parent=1 // pred_check_branch
      %613 = sbr.rel (0) target = $region29
    $region28: #{tpu_custom_call.1} parent=1 // pred_region
      %s615 = ssub.s32 128, 128
      %616 = vsyncadd [#allocation4], %s615
      %s618 = sshll.u32 [#allocation7], 4
      %s619 = int_to_ptr.vmem [resolvable:$true] %s618
      %621 = dma.vmem_to_hbm [thread:$0]  %s619, 128, %s4, [#allocation4]
    $region29: #{tpu_custom_call.1} parent=1 // pred_fallthru
      _
    // Predicated region
    $region30: #{tpu_custom_call.1} parent=1 // pred_check
      _
    $region31: #{tpu_custom_call.1} parent=1 // pred_check_branch
      %623 = sbr.rel (0) target = $region33
    $region32: #{tpu_custom_call.1} parent=1 // pred_region
      %624 = dma.done [#allocation4], 128
    $region33: #{tpu_custom_call.1} parent=1 // pred_fallthru
      _
    %625 = vsyncpa [#allocation3], 1
    %626 = vsyncpa [#allocation6], 1
    %627 = vsyncpa [#allocation4], 1

</llo_original>
